<compile_context>
chip_gen: v5e
topology: v5e:2x2
jax: 0.10.0
libtpu: 0.0.40
codegen_flags: <defaults>
</compile_context>

<pallas_src>
import functools

import numpy as np
import jax
import jax.numpy as jnp
from jax.experimental import pallas as pl
from jax.experimental.pallas import tpu as pltpu

WEIGHTS = (1.428, 40.097)  # per-class weights from the reference module


def _round_up(x, m):
    return ((x + m - 1) // m) * m


def _cdiv(a, b):
    return -(-a // b)


def _lovasz_kernel(ddiff_ref, mask_ref, msum_ref, tri_ref, out_ref,
                   lane_ref, carry_cm_ref, acc_ref, *, approx_recip):
    k = pl.program_id(1)            # P-block index (reduction axis, runs last)
    TR, PB = mask_ref.shape

    @pl.when(k == 0)
    def _():
        # Per-sweep init: lane positions (f32, exact for P < 2^24), cumsum carry and
        # the deferred-reduction accumulator.
        lane_ref[...] = jax.lax.broadcasted_iota(
            jnp.int32, (TR, PB), 1).astype(jnp.float32)
        carry_cm_ref[...] = jnp.zeros_like(carry_cm_ref)
        acc_ref[...] = jnp.zeros_like(acc_ref)

    m = mask_ref[...]               # (TR, PB) bf16 {0,1} mask, sort-permuted
    msum = msum_ref[...]            # (TR, 1)  f32  full-row mask sum

    # In-block inclusive cumsum of the mask on the MXU (single bf16 matmul, exact for
    # 0/1 entries), plus the carried prefix sum of all earlier P-blocks.
    cum_local = jnp.dot(m, tri_ref[...], preferred_element_type=jnp.float32)
    cum_m = carry_cm_ref[...] + cum_local                       # (TR, PB)

    # inter = msum - cumsum(m);   union = msum + cumsum(1-m) = inter + (g + 1)
    offset = (k * PB + 1).astype(jnp.float32)
    pos = lane_ref[...] + offset                                # global g + 1
    inter = msum - cum_m
    union = inter + pos
    if approx_recip:
        # EUP reciprocal (v7x compute-bound path); re-validate tolerances before use.
        iou = 1.0 - inter * pl.reciprocal(union, approx=True)
    else:
        iou = 1.0 - inter / union                               # (TR, PB)

    # dot(dist_sorted, lovasz_grad) == sum(iou * ddiff) with
    # ddiff[g] = dist_sorted[g] - dist_sorted[g+1] (precomputed in the wrapper).
    acc_ref[...] += ddiff_ref[...].astype(jnp.float32) * iou

    # Cumsum carry for the next P-block of this row tile.
    carry_cm_ref[...] = cum_m[:, PB - 1:PB]

    @pl.when(k == pl.num_programs(1) - 1)
    def _():
        out_ref[...] = jnp.sum(acc_ref[...], axis=-1, keepdims=True)   # (TR, 1)


def lovasz_loss(inputs, targets, *, tile_rows=512, max_p_block=512,
                dist_dtype=jnp.bfloat16, approx_recip=False):
    """inputs: (N, C, H, W) float, targets: (N, H, W) int. Returns scalar loss."""
    N, C, H, W = inputs.shape
    P = H * W
    R = C * N
    assert P < (1 << 24), "lane positions carried in f32 require H*W < 2^24"

    inp_f = inputs.astype(jnp.float32)
    # rows ordered r = c*N + n (matches the PyTorch double loop: class-major)
    x_rows = jnp.transpose(inp_f, (1, 0, 2, 3)).reshape(R, P)
    cls = jnp.arange(C, dtype=targets.dtype)
    m_rows = (targets[None] == cls[:, None, None, None]).astype(jnp.float32)
    m_rows = m_rows.reshape(R, P)
    dist = jnp.abs(m_rows - x_rows)

    # TODO(synk): descending sort (torch.sort) has no clean Pallas/Mosaic TPU
    # lowering; done in plain-JAX glue.  Tie order does not affect the result.
    order = jnp.argsort(-dist, axis=-1)
    dist_s = jnp.take_along_axis(dist, order, axis=-1)
    mask_s = jnp.take_along_axis(m_rows, order, axis=-1)

    # Summation-by-parts: dot(dist_s, diff(iou)) == dot(iou, ddiff) with
    # ddiff[g] = dist_s[g] - dist_s[g+1]  (dist_s[P] := 0).  This removes the
    # in-kernel lane shift / lane-0 select / iou carry entirely.
    ddiff = dist_s - jnp.concatenate(
        [dist_s[:, 1:], jnp.zeros((R, 1), dist_s.dtype)], axis=1)

    # Per-row scalars (needed up-front by the P-blocked kernel): total mask sum,
    # skip-row test and class weight (applied to the kernel's per-row dot).
    msum = jnp.sum(m_rows, axis=-1, keepdims=True)                       # (R, 1)
    has_pos = jnp.sum((x_rows > 0.25).astype(jnp.float32), axis=-1)      # (R,)
    valid = ((msum[:, 0] > 0.0) | (has_pos > 0.0)).astype(jnp.float32)   # (R,)
    w = jnp.repeat(jnp.asarray(WEIGHTS[:C], dtype=jnp.float32), N)       # (R,)

    # --- pad to TPU-friendly tiles (rows: multiple of 16 for the bf16 streams) ---
    # Row tile chosen so the "parallel" row axis has >= 2 iterations when possible
    # (v7x megacore); PB kept <= ~512 (beyond that v5e tips MXU-bound).
    TR = min(_round_up(tile_rows, 16), _round_up(_cdiv(R, 2), 16))
    r_pad = _round_up(R, TR)
    p128 = _round_up(P, 128)
    PB = min(p128, _round_up(max_p_block, 128))
    p_pad = _round_up(p128, PB)

    # Cast BEFORE padding so the padded buffers are only materialized once, in the
    # narrow dtype.
    ddiff_p = jnp.pad(ddiff.astype(dist_dtype), ((0, r_pad - R), (0, p_pad - P)))
    mask_p = jnp.pad(mask_s.astype(jnp.bfloat16), ((0, r_pad - R), (0, p_pad - P)))
    msum_p = jnp.pad(msum, ((0, r_pad - R), (0, 0)))

    # (PB, PB) upper-triangular cumsum operator, shipped once as a resident input.
    ri = jax.lax.broadcasted_iota(jnp.int32, (PB, PB), 0)
    ci = jax.lax.broadcasted_iota(jnp.int32, (PB, PB), 1)
    tri = (ri <= ci).astype(jnp.bfloat16)

    grid = (r_pad // TR, p_pad // PB)
    kernel = functools.partial(_lovasz_kernel, approx_recip=approx_recip)
    row_dot = pl.pallas_call(
        kernel,
        out_shape=jax.ShapeDtypeStruct((r_pad, 1), jnp.float32),
        grid_spec=pltpu.PrefetchScalarGridSpec(
            num_scalar_prefetch=0,
            grid=grid,
            in_specs=[
                pl.BlockSpec((TR, PB), lambda i, k: (i, k)),   # sorted-dist first diff
                pl.BlockSpec((TR, PB), lambda i, k: (i, k)),   # sorted mask (bf16)
                pl.BlockSpec((TR, 1), lambda i, k: (i, 0)),    # full-row mask sum
                pl.BlockSpec((PB, PB), lambda i, k: (0, 0)),   # tri (resident, 1 DMA)
            ],
            out_specs=pl.BlockSpec((TR, 1), lambda i, k: (i, 0)),
            scratch_shapes=[
                pltpu.VMEM((TR, PB), jnp.float32),    # lane iota (per-sweep constant)
                pltpu.VMEM((TR, 1), jnp.float32),     # cumsum carry across P-blocks
                pltpu.VMEM((TR, PB), jnp.float32),    # deferred-reduction accumulator
            ],
        ),
        compiler_params=pltpu.CompilerParams(
            dimension_semantics=("parallel", "arbitrary"),
            vmem_limit_bytes=32 * 1024 * 1024,
        ),
    )(ddiff_p, mask_p, msum_p, tri)

    loss = jnp.sum(row_dot[:R, 0] * w * valid)
    cnt = jnp.sum(valid)
    return loss / N / cnt


def lovasz_ref_numpy(inputs, targets):
    """Direct NumPy transcription of the PyTorch forward (for verification)."""
    inputs = np.asarray(inputs, dtype=np.float32)
    targets = np.asarray(targets)
    N, C, H, W = inputs.shape
    loss = 0.0
    non_empty = 0
    for c in range(C):
        inp_c = inputs[:, c].reshape(N, -1)
        masks = (targets == c).astype(np.float32).reshape(N, -1)
        for n in range(N):
            mask, ic = masks[n], inp_c[n]
            if mask.sum() == 0 and (ic > 0.25).sum() == 0:
                continue
            dist = np.abs(mask - ic)
            order = np.argsort(-dist, kind="stable")
            ds, ms = dist[order], mask[order]
            inter = ms.sum() - np.cumsum(ms)
            union = ms.sum() + np.cumsum(1.0 - ms)
            iou = 1.0 - inter / union
            iou[1:] = iou[1:] - iou[:-1]
            loss += float(np.dot(ds, iou)) * WEIGHTS[c]
            non_empty += 1
    return loss / N / non_empty


if __name__ == "__main__":
    key = jax.random.PRNGKey(0)
    k1, k2, k3, k4 = jax.random.split(key, 4)

    # Small case consistent with the module (C = len(weights) = 2), single P-block.
    N, C, H, W = 2, 2, 16, 16
    inputs = jax.random.uniform(k1, (N, C, H, W), dtype=jnp.float32)
    targets = jax.random.randint(k2, (N, H, W), 0, C, dtype=jnp.int32)
    ref = lovasz_ref_numpy(inputs, targets)

    # (a) exact-math path (f32 dist stream): tight tolerance.
    f_f32 = jax.jit(lambda a, b: lovasz_loss(a, b, dist_dtype=jnp.float32))
    out_f32 = jax.block_until_ready(f_f32(inputs, targets))
    np.testing.assert_allclose(np.asarray(out_f32), ref, rtol=2e-4, atol=1e-5)

    # (b) default bf16 dist stream (perf config): looser tolerance reflects the
    #     bf16 quantisation of the dist differences (accumulation stays f32).
    out_bf16 = jax.block_until_ready(jax.jit(lovasz_loss)(inputs, targets))
    np.testing.assert_allclose(np.asarray(out_bf16), ref, rtol=5e-3, atol=1e-4)

    # Larger case exercising multiple row tiles (parallel/megacore axis) and multiple
    # P-blocks (cumsum carry across the blocked pixel axis).
    N2, C2, H2, W2 = 10, 2, 32, 32
    inputs2 = jax.random.uniform(k3, (N2, C2, H2, W2), dtype=jnp.float32)
    targets2 = jax.random.randint(k4, (N2, H2, W2), 0, C2, dtype=jnp.int32)
    f2 = jax.jit(lambda a, b: lovasz_loss(a, b, tile_rows=16, max_p_block=256))
    out2 = jax.block_until_ready(f2(inputs2, targets2))
    ref2 = lovasz_ref_numpy(inputs2, targets2)
    np.testing.assert_allclose(np.asarray(out2), ref2, rtol=5e-3, atol=1e-4)

    print("KERNEL_OK")
</pallas_src>

<mosaic_0001>
module attributes {stable_mosaic.version = 11 : i64} {
  func.func @_lovasz_kernel(%arg0: i32, %arg1: i32, %arg2: memref<16x256xf32, #tpu.memory_space<vmem>>, %arg3: memref<16x256xbf16, #tpu.memory_space<vmem>>, %arg4: memref<16x1xf32, #tpu.memory_space<vmem>>, %arg5: memref<256x256xbf16, #tpu.memory_space<vmem>>, %arg6: memref<16x1xf32, #tpu.memory_space<vmem>>, %arg7: memref<16x256xf32, #tpu.memory_space<vmem>>, %arg8: memref<16x1xf32, #tpu.memory_space<vmem>>, %arg9: memref<16x256xf32, #tpu.memory_space<vmem>>) attributes {dimension_semantics = [#tpu.dimension_semantics<parallel>, #tpu.dimension_semantics<arbitrary>], iteration_bounds = array<i64: 1, 1>, scalar_prefetch = 0 : i64, scratch_operands = 3 : i64, tpu.core_type = #tpu.core_type<tc>, window_params = [{transform_indices = @transform_0, window_bounds = array<i64: 16, 256>}, {transform_indices = @transform_1, window_bounds = array<i64: 16, 256>}, {transform_indices = @transform_2, window_bounds = array<i64: 16, 1>}, {pipeline_mode = #tpu.pipeline_mode<synchronous>, transform_indices = @transform_3, window_bounds = array<i64: 256, 256>}, {transform_indices = @transform_4, window_bounds = array<i64: 16, 1>}]} {
    %c0_i32 = arith.constant 0 : i32
    %0 = arith.cmpi eq, %arg1, %c0_i32 : i32
    %1 = arith.extui %0 : i1 to i32
    %c0_i32_0 = arith.constant 0 : i32
    %2 = arith.cmpi ne, %1, %c0_i32_0 : i32
    scf.if %2 {
      %32 = tpu.iota {dimensions = array<i32: 1>} : vector<16x256xi32>
      %33 = arith.sitofp %32 : vector<16x256xi32> to vector<16x256xf32>
      %c0_21 = arith.constant 0 : index
      %c0_22 = arith.constant 0 : index
      %34 = vector.load %arg7[%c0_21, %c0_22] : memref<16x256xf32, #tpu.memory_space<vmem>>, vector<16x256xf32>
      tpu.vector_store %arg7[%c0_21, %c0_22], %33 {strides = array<i32>} : memref<16x256xf32, #tpu.memory_space<vmem>>, vector<16x256xf32>,
      %cst_23 = arith.constant 0.000000e+00 : f32
      %35 = vector.broadcast %cst_23 : f32 to vector<16x1xf32>
      %c0_24 = arith.constant 0 : index
      %c0_25 = arith.constant 0 : index
      %36 = vector.load %arg8[%c0_24, %c0_25] : memref<16x1xf32, #tpu.memory_space<vmem>>, vector<16x1xf32>
      tpu.vector_store %arg8[%c0_24, %c0_25], %35 {strides = array<i32>} : memref<16x1xf32, #tpu.memory_space<vmem>>, vector<16x1xf32>,
      %cst_26 = arith.constant 0.000000e+00 : f32
      %37 = vector.broadcast %cst_26 : f32 to vector<16x256xf32>
      %c0_27 = arith.constant 0 : index
      %c0_28 = arith.constant 0 : index
      %38 = vector.load %arg9[%c0_27, %c0_28] : memref<16x256xf32, #tpu.memory_space<vmem>>, vector<16x256xf32>
      tpu.vector_store %arg9[%c0_27, %c0_28], %37 {strides = array<i32>} : memref<16x256xf32, #tpu.memory_space<vmem>>, vector<16x256xf32>,
    } else {
    }
    %c0 = arith.constant 0 : index
    %c0_1 = arith.constant 0 : index
    %3 = vector.load %arg3[%c0, %c0_1] : memref<16x256xbf16, #tpu.memory_space<vmem>>, vector<16x256xbf16>
    %c0_2 = arith.constant 0 : index
    %c0_3 = arith.constant 0 : index
    %4 = vector.load %arg4[%c0_2, %c0_3] : memref<16x1xf32, #tpu.memory_space<vmem>>, vector<16x1xf32>
    %c0_4 = arith.constant 0 : index
    %c0_5 = arith.constant 0 : index
    %5 = vector.load %arg5[%c0_4, %c0_5] : memref<256x256xbf16, #tpu.memory_space<vmem>>, vector<256x256xbf16>
    %cst = arith.constant dense<0.000000e+00> : vector<16x256xf32>
    %6 = tpu.matmul %3, %5, %cst {dimension_numbers = #tpu.dot_dimension_numbers<[1], [0], [0], [1], [0, 0, 1, 1], [], []>} : vector<16x256xbf16>, vector<256x256xbf16>, vector<16x256xf32> -> vector<16x256xf32>
    %c0_6 = arith.constant 0 : index
    %c0_7 = arith.constant 0 : index
    %7 = vector.load %arg8[%c0_6, %c0_7] : memref<16x1xf32, #tpu.memory_space<vmem>>, vector<16x1xf32>
    %8 = vector.broadcast %7 : vector<16x1xf32> to vector<16x256xf32>
    %9 = arith.addf %8, %6 : vector<16x256xf32>
    %c256_i32 = arith.constant 256 : i32
    %10 = arith.muli %arg1, %c256_i32 : i32
    %c1_i32 = arith.constant 1 : i32
    %11 = arith.addi %10, %c1_i32 : i32
    %12 = arith.sitofp %11 : i32 to f32
    %c0_8 = arith.constant 0 : index
    %c0_9 = arith.constant 0 : index
    %13 = vector.load %arg7[%c0_8, %c0_9] : memref<16x256xf32, #tpu.memory_space<vmem>>, vector<16x256xf32>
    %14 = vector.broadcast %12 : f32 to vector<16x256xf32>
    %15 = arith.addf %13, %14 : vector<16x256xf32>
    %16 = vector.broadcast %4 : vector<16x1xf32> to vector<16x256xf32>
    %17 = arith.subf %16, %9 : vector<16x256xf32>
    %18 = arith.addf %17, %15 : vector<16x256xf32>
    %19 = arith.divf %17, %18 : vector<16x256xf32>
    %cst_10 = arith.constant 1.000000e+00 : f32
    %20 = vector.broadcast %cst_10 : f32 to vector<16x256xf32>
    %21 = arith.subf %20, %19 : vector<16x256xf32>
    %c0_11 = arith.constant 0 : index
    %c0_12 = arith.constant 0 : index
    %22 = vector.load %arg9[%c0_11, %c0_12] : memref<16x256xf32, #tpu.memory_space<vmem>>, vector<16x256xf32>
    %c0_13 = arith.constant 0 : index
    %c0_14 = arith.constant 0 : index
    %23 = vector.load %arg2[%c0_13, %c0_14] : memref<16x256xf32, #tpu.memory_space<vmem>>, vector<16x256xf32>
    %24 = arith.mulf %23, %21 : vector<16x256xf32>
    %25 = arith.addf %22, %24 : vector<16x256xf32>
    %c0_15 = arith.constant 0 : index
    %c0_16 = arith.constant 0 : index
    %26 = vector.load %arg9[%c0_15, %c0_16] : memref<16x256xf32, #tpu.memory_space<vmem>>, vector<16x256xf32>
    tpu.vector_store %arg9[%c0_15, %c0_16], %25 {strides = array<i32>} : memref<16x256xf32, #tpu.memory_space<vmem>>, vector<16x256xf32>,
    %27 = vector.extract_strided_slice %9 {offsets = [0, 255], sizes = [16, 1], strides = [1, 1]} : vector<16x256xf32> to vector<16x1xf32>
    %c0_17 = arith.constant 0 : index
    %c0_18 = arith.constant 0 : index
    %28 = vector.load %arg8[%c0_17, %c0_18] : memref<16x1xf32, #tpu.memory_space<vmem>>, vector<16x1xf32>
    tpu.vector_store %arg8[%c0_17, %c0_18], %27 {strides = array<i32>} : memref<16x1xf32, #tpu.memory_space<vmem>>, vector<16x1xf32>,
    %c0_i32_19 = arith.constant 0 : i32
    %29 = arith.cmpi eq, %arg1, %c0_i32_19 : i32
    %30 = arith.extui %29 : i1 to i32
    %c0_i32_20 = arith.constant 0 : i32
    %31 = arith.cmpi ne, %30, %c0_i32_20 : i32
    scf.if %31 {
      %c0_21 = arith.constant 0 : index
      %c0_22 = arith.constant 0 : index
      %32 = vector.load %arg9[%c0_21, %c0_22] : memref<16x256xf32, #tpu.memory_space<vmem>>, vector<16x256xf32>
      %cst_23 = arith.constant dense<0.000000e+00> : vector<16xf32>
      %33 = vector.multi_reduction <add>, %32, %cst_23 [1] : vector<16x256xf32> to vector<16xf32>
      %34 = vector.shape_cast %33 : vector<16xf32> to vector<16x1xf32>
      %c0_24 = arith.constant 0 : index
      %c0_25 = arith.constant 0 : index
      %35 = vector.load %arg6[%c0_24, %c0_25] : memref<16x1xf32, #tpu.memory_space<vmem>>, vector<16x1xf32>
      tpu.vector_store %arg6[%c0_24, %c0_25], %34 {strides = array<i32>} : memref<16x1xf32, #tpu.memory_space<vmem>>, vector<16x1xf32>,
    } else {
    }
    return
  }
  func.func @transform_0(%arg0: i32, %arg1: i32) -> (i32, i32) {
    %c0_i32 = arith.constant 0 : i32
    return %arg0, %arg1 : i32, i32
  }
  func.func @transform_1(%arg0: i32, %arg1: i32) -> (i32, i32) {
    %c0_i32 = arith.constant 0 : i32
    return %arg0, %arg1 : i32, i32
  }
  func.func @transform_2(%arg0: i32, %arg1: i32) -> (i32, i32) {
    %c0_i32 = arith.constant 0 : i32
    %c0_i32_0 = arith.constant 0 : i32
    return %arg0, %c0_i32 : i32, i32
  }
  func.func @transform_3(%arg0: i32, %arg1: i32) -> (i32, i32) {
    %c0_i32 = arith.constant 0 : i32
    %c0_i32_0 = arith.constant 0 : i32
    %c0_i32_1 = arith.constant 0 : i32
    return %c0_i32, %c0_i32_0 : i32, i32
  }
  func.func @transform_4(%arg0: i32, %arg1: i32) -> (i32, i32) {
    %c0_i32 = arith.constant 0 : i32
    %c0_i32_0 = arith.constant 0 : i32
    return %arg0, %c0_i32 : i32, i32
  }
}

</mosaic_0001>

<llo_original>
// kernel: _lambda_.1
$region0: #{_lambda_.1}
  #allocation0 [shape = 'u32[]', space=smem, size = 0x4, offset = 0x4, fixed_abs, tag = 'smem constant byte address 0x4 - core index']
  #allocation1 [shape = 'u32[72,128]{1,0:T(1,128)}', space=vmem, size = 0x9000, scoped, tag = 'internal scratch']
  #allocation2 [shape = 'f32[16,256]{1,0:T(8,128)}', space=vmem, size = 0x4000, scoped, tag = 'scratch operand']
  #allocation3 [shape = 'f32[16,1]{1,0:T(8,128)}', space=vmem, size = 0x2000, scoped, tag = 'scratch operand']
  #allocation4 [shape = 'f32[16,256]{1,0:T(8,128)}', space=vmem, size = 0x4000, scoped, tag = 'scratch operand']
  %s0 = inlined_call_operand.vmem [shape: f32[16,256], index: 0, kind: input, shape index: {}]
  %s1 = inlined_call_operand.vmem [shape: bf16[16,256], index: 1, kind: input, shape index: {}]
  %s2 = inlined_call_operand.vmem [shape: f32[16,1], index: 2, kind: input, shape index: {}]
  %s3 = inlined_call_operand.vmem [shape: bf16[256,256], index: 3, kind: input, shape index: {}]
  %s4 = inlined_call_operand.vmem [shape: f32[16,1], index: 4, kind: output, shape index: {}]
  %s5 = sld [smem:[#allocation0]]
  $region34: #{_lambda_.1} parent=0
    _
  %s7 = ssub.s32 1, %s5
  %s8 = scalar_select 0, %s7, %s5
  // Predicated region
  $region2: #{_lambda_.1} parent=0 // pred_check
    _
  $region3: #{_lambda_.1} parent=0 // pred_check_branch
    %10 = sbr.rel (0) target = $region5
  $region4: #{_lambda_.1} parent=0 // pred_region
    _
  $region5: #{_lambda_.1} parent=0 // pred_fallthru
    _
  // Predicated region
  $region6: #{_lambda_.1} parent=0 // pred_check
    _
  $region7: #{_lambda_.1} parent=0 // pred_check_branch
    %12 = sbr.rel (0) target = $region9
  $region8: #{_lambda_.1} parent=0 // pred_region
    _
  $region9: #{_lambda_.1} parent=0 // pred_fallthru
    _
  // Predicated region
  $region10: #{_lambda_.1} parent=0 // pred_check
    _
  $region11: #{_lambda_.1} parent=0 // pred_check_branch
    %14 = sbr.rel (0) target = $region13
  $region12: #{_lambda_.1} parent=0 // pred_region
    _
  $region13: #{_lambda_.1} parent=0 // pred_fallthru
    _
  // Predicated region
  $region14: #{_lambda_.1} parent=0 // pred_check
    _
  $region15: #{_lambda_.1} parent=0 // pred_check_branch
    %16 = sbr.rel (0) target = $region17
  $region16: #{_lambda_.1} parent=0 // pred_region
    _
  $region17: #{_lambda_.1} parent=0 // pred_fallthru
    _
  %p17 = scmp.eq.s32.totalorder 0, 0
  // Predicated region
  $region18: #{_lambda_.1} parent=0 // pred_check
    %p18 = pneg %p17
  $region19: #{_lambda_.1} parent=0 // pred_check_branch
    %20 = sbr.rel (%p18) target = $region21
  $region20: #{_lambda_.1} parent=0 // pred_region
    %v21 = vlaneseq
    %v22 = vand.u32 %v21, 127
    %v23 = vadd.s32 %v22, 128
    %v24 = vcvt.s32.f32 %v22
    %v25 = vcvt.s32.f32 %v23
    %26 = vst [vmem:[#allocation2] sm:$0xff] %v24
    %27 = vst [vmem:[#allocation2 + $0x8] sm:$0xff] %v25
    %28 = vst [vmem:[#allocation2 + $0x10] sm:$0xff] %v24
    %29 = vst [vmem:[#allocation2 + $0x18] sm:$0xff] %v25
    %vm30 = vcmask 7168
    %31 = vst.msk [vmem:[#allocation3] sm:$0xff] %vm30, 0.0
    %32 = vst.msk [vmem:[#allocation3 + $0x8] sm:$0xff] %vm30, 0.0
    %33 = vst [vmem:[#allocation4] sm:$0xff] 0.0
    %34 = vst [vmem:[#allocation4 + $0x8] sm:$0xff] 0.0
    %35 = vst [vmem:[#allocation4 + $0x10] sm:$0xff] 0.0
    %36 = vst [vmem:[#allocation4 + $0x18] sm:$0xff] 0.0
  $region21: #{_lambda_.1} parent=0 // pred_fallthru
    _
  %v37 = vld [vmem:[%s1] sm:$0xff]
  %v38 = vld [vmem:[%s1 + $0x8] sm:$0xff]
  %v39 = vld [vmem:[%s2] sm:$0xff]
  %v40 = vld [vmem:[%s2 + $0x8] sm:$0xff]
  %v41 = vld [vmem:[%s3] sm:$0xff]
  %v42 = vld [vmem:[%s3 + $0x8] sm:$0xff]
  %v43 = vld [vmem:[%s3 + $0x10] sm:$0xff]
  %v44 = vld [vmem:[%s3 + $0x18] sm:$0xff]
  %v45 = vld [vmem:[%s3 + $0x20] sm:$0xff]
  %v46 = vld [vmem:[%s3 + $0x28] sm:$0xff]
  %v47 = vld [vmem:[%s3 + $0x30] sm:$0xff]
  %v48 = vld [vmem:[%s3 + $0x38] sm:$0xff]
  %v49 = vld [vmem:[%s3 + $0x40] sm:$0xff]
  %v50 = vld [vmem:[%s3 + $0x48] sm:$0xff]
  %v51 = vld [vmem:[%s3 + $0x50] sm:$0xff]
  %v52 = vld [vmem:[%s3 + $0x58] sm:$0xff]
  %v53 = vld [vmem:[%s3 + $0x60] sm:$0xff]
  %v54 = vld [vmem:[%s3 + $0x68] sm:$0xff]
  %v55 = vld [vmem:[%s3 + $0x70] sm:$0xff]
  %v56 = vld [vmem:[%s3 + $0x78] sm:$0xff]
  %v57 = vld [vmem:[%s3 + $0x80] sm:$0xff]
  %v58 = vld [vmem:[%s3 + $0x88] sm:$0xff]
  %v59 = vld [vmem:[%s3 + $0x90] sm:$0xff]
  %v60 = vld [vmem:[%s3 + $0x98] sm:$0xff]
  %v61 = vld [vmem:[%s3 + $0xa0] sm:$0xff]
  %v62 = vld [vmem:[%s3 + $0xa8] sm:$0xff]
  %v63 = vld [vmem:[%s3 + $0xb0] sm:$0xff]
  %v64 = vld [vmem:[%s3 + $0xb8] sm:$0xff]
  %v65 = vld [vmem:[%s3 + $0xc0] sm:$0xff]
  %v66 = vld [vmem:[%s3 + $0xc8] sm:$0xff]
  %v67 = vld [vmem:[%s3 + $0xd0] sm:$0xff]
  %v68 = vld [vmem:[%s3 + $0xd8] sm:$0xff]
  %v69 = vld [vmem:[%s3 + $0xe0] sm:$0xff]
  %v70 = vld [vmem:[%s3 + $0xe8] sm:$0xff]
  %v71 = vld [vmem:[%s3 + $0xf0] sm:$0xff]
  %v72 = vld [vmem:[%s3 + $0xf8] sm:$0xff]
  %v75 = vunpack.c.l.b16 %v37
  %v76 = vunpack.c.h.b16 %v37
  %v77 = vunpack.c.l.b16 %v38
  %v78 = vunpack.c.h.b16 %v38
  %v79 = vpack.c.b16 %v77, %v75
  %v80 = vpack.c.b16 %v78, %v76
  %v115 = vunpack.c.l.b16 %v41
  %v116 = vunpack.c.h.b16 %v41
  %v117 = vunpack.c.l.b16 %v42
  %v118 = vunpack.c.h.b16 %v42
  %v119 = vunpack.c.l.b16 %v43
  %v120 = vunpack.c.h.b16 %v43
  %v121 = vunpack.c.l.b16 %v44
  %v122 = vunpack.c.h.b16 %v44
  %v123 = vunpack.c.l.b16 %v45
  %v124 = vunpack.c.h.b16 %v45
  %v125 = vunpack.c.l.b16 %v46
  %v126 = vunpack.c.h.b16 %v46
  %v127 = vunpack.c.l.b16 %v47
  %v128 = vunpack.c.h.b16 %v47
  %v129 = vunpack.c.l.b16 %v48
  %v130 = vunpack.c.h.b16 %v48
  %v131 = vunpack.c.l.b16 %v49
  %v132 = vunpack.c.h.b16 %v49
  %v133 = vunpack.c.l.b16 %v50
  %v134 = vunpack.c.h.b16 %v50
  %v135 = vunpack.c.l.b16 %v51
  %v136 = vunpack.c.h.b16 %v51
  %v137 = vunpack.c.l.b16 %v52
  %v138 = vunpack.c.h.b16 %v52
  %v139 = vunpack.c.l.b16 %v53
  %v140 = vunpack.c.h.b16 %v53
  %v141 = vunpack.c.l.b16 %v54
  %v142 = vunpack.c.h.b16 %v54
  %v143 = vunpack.c.l.b16 %v55
  %v144 = vunpack.c.h.b16 %v55
  %v145 = vunpack.c.l.b16 %v56
  %v146 = vunpack.c.h.b16 %v56
  %v147 = vunpack.c.l.b16 %v57
  %v148 = vunpack.c.h.b16 %v57
  %v149 = vunpack.c.l.b16 %v58
  %v150 = vunpack.c.h.b16 %v58
  %v151 = vunpack.c.l.b16 %v59
  %v152 = vunpack.c.h.b16 %v59
  %v153 = vunpack.c.l.b16 %v60
  %v154 = vunpack.c.h.b16 %v60
  %v155 = vunpack.c.l.b16 %v61
  %v156 = vunpack.c.h.b16 %v61
  %v157 = vunpack.c.l.b16 %v62
  %v158 = vunpack.c.h.b16 %v62
  %v159 = vunpack.c.l.b16 %v63
  %v160 = vunpack.c.h.b16 %v63
  %v161 = vunpack.c.l.b16 %v64
  %v162 = vunpack.c.h.b16 %v64
  %v163 = vunpack.c.l.b16 %v65
  %v164 = vunpack.c.h.b16 %v65
  %v165 = vunpack.c.l.b16 %v66
  %v166 = vunpack.c.h.b16 %v66
  %v167 = vunpack.c.l.b16 %v67
  %v168 = vunpack.c.h.b16 %v67
  %v169 = vunpack.c.l.b16 %v68
  %v170 = vunpack.c.h.b16 %v68
  %v171 = vunpack.c.l.b16 %v69
  %v172 = vunpack.c.h.b16 %v69
  %v173 = vunpack.c.l.b16 %v70
  %v174 = vunpack.c.h.b16 %v70
  %v175 = vunpack.c.l.b16 %v71
  %v176 = vunpack.c.h.b16 %v71
  %v177 = vunpack.c.l.b16 %v72
  %v178 = vunpack.c.h.b16 %v72
  %v179 = vpack.c.b16 %v117, %v115
  %v180 = vpack.c.b16 %v118, %v116
  %v181 = vpack.c.b16 %v121, %v119
  %v182 = vpack.c.b16 %v122, %v120
  %v183 = vpack.c.b16 %v125, %v123
  %v184 = vpack.c.b16 %v126, %v124
  %v185 = vpack.c.b16 %v129, %v127
  %v186 = vpack.c.b16 %v130, %v128
  %v187 = vpack.c.b16 %v133, %v131
  %v188 = vpack.c.b16 %v134, %v132
  %v189 = vpack.c.b16 %v137, %v135
  %v190 = vpack.c.b16 %v138, %v136
  %v191 = vpack.c.b16 %v141, %v139
  %v192 = vpack.c.b16 %v142, %v140
  %v193 = vpack.c.b16 %v145, %v143
  %v194 = vpack.c.b16 %v146, %v144
  %v195 = vpack.c.b16 %v149, %v147
  %v196 = vpack.c.b16 %v150, %v148
  %v197 = vpack.c.b16 %v153, %v151
  %v198 = vpack.c.b16 %v154, %v152
  %v199 = vpack.c.b16 %v157, %v155
  %v200 = vpack.c.b16 %v158, %v156
  %v201 = vpack.c.b16 %v161, %v159
  %v202 = vpack.c.b16 %v162, %v160
  %v203 = vpack.c.b16 %v165, %v163
  %v204 = vpack.c.b16 %v166, %v164
  %v205 = vpack.c.b16 %v169, %v167
  %v206 = vpack.c.b16 %v170, %v168
  %v207 = vpack.c.b16 %v173, %v171
  %v208 = vpack.c.b16 %v174, %v172
  %v209 = vpack.c.b16 %v177, %v175
  %v210 = vpack.c.b16 %v178, %v176
  %243 = vmatpush.bf16.msra.mxu0 %v193
  %244 = vmatpush.bf16.msra.mxu0 %v191
  %245 = vmatpush.bf16.msra.mxu0 %v189
  %246 = vmatpush.bf16.msra.mxu0 %v187
  %247 = vmatpush.bf16.msra.mxu0 %v185
  %248 = vmatpush.bf16.msra.mxu0 %v183
  %249 = vmatpush.bf16.msra.mxu0 %v181
  %250 = vmatpush.bf16.msra.mxu0 %v179
  %251 = vmatmul.bf16.gmra.mxu0 %v79
  %v252 = vpop.f32.mrf.mxu0
  %v253 = vadd.f32 0.0, %v252
  %v254 = vpop.f32.mrf.mxu0
  %v255 = vadd.f32 0.0, %v254
  %256 = vdwg.mxu0
  %257 = vmatpush.bf16.msra.mxu0 %v209
  %258 = vmatpush.bf16.msra.mxu0 %v207
  %259 = vmatpush.bf16.msra.mxu0 %v205
  %260 = vmatpush.bf16.msra.mxu0 %v203
  %261 = vmatpush.bf16.msra.mxu0 %v201
  %262 = vmatpush.bf16.msra.mxu0 %v199
  %263 = vmatpush.bf16.msra.mxu0 %v197
  %264 = vmatpush.bf16.msra.mxu0 %v195
  %265 = vmatmul.bf16.gmra.mxu0 %v80
  %v266 = vpop.f32.mrf.mxu0
  %v267 = vadd.f32 %v253, %v266
  %v268 = vpop.f32.mrf.mxu0
  %v269 = vadd.f32 %v255, %v268
  %270 = vdwg.mxu0
  %271 = vmatpush.bf16.msra.mxu0 %v194
  %272 = vmatpush.bf16.msra.mxu0 %v192
  %273 = vmatpush.bf16.msra.mxu0 %v190
  %274 = vmatpush.bf16.msra.mxu0 %v188
  %275 = vmatpush.bf16.msra.mxu0 %v186
  %276 = vmatpush.bf16.msra.mxu0 %v184
  %277 = vmatpush.bf16.msra.mxu0 %v182
  %278 = vmatpush.bf16.msra.mxu0 %v180
  %279 = vmatmul.bf16.gmra.mxu0 %v79
  %v280 = vpop.f32.mrf.mxu0
  %v281 = vadd.f32 0.0, %v280
  %v282 = vpop.f32.mrf.mxu0
  %v283 = vadd.f32 0.0, %v282
  %284 = vdwg.mxu0
  %285 = vmatpush.bf16.msra.mxu0 %v210
  %286 = vmatpush.bf16.msra.mxu0 %v208
  %287 = vmatpush.bf16.msra.mxu0 %v206
  %288 = vmatpush.bf16.msra.mxu0 %v204
  %289 = vmatpush.bf16.msra.mxu0 %v202
  %290 = vmatpush.bf16.msra.mxu0 %v200
  %291 = vmatpush.bf16.msra.mxu0 %v198
  %292 = vmatpush.bf16.msra.mxu0 %v196
  %293 = vmatmul.bf16.gmra.mxu0 %v80
  %v294 = vpop.f32.mrf.mxu0
  %v295 = vadd.f32 %v281, %v294
  %v296 = vpop.f32.mrf.mxu0
  %v297 = vadd.f32 %v283, %v296
  %298 = vdwg.mxu0
  %v299 = vld [vmem:[#allocation3] sm:$0xff]
  %v300 = vld [vmem:[#allocation3 + $0x8] sm:$0xff]
  %302 = vset.pattern.permute.xlu0 0
  %303 = vperm.xlu0 %302, %v299
  %v304 = vpop.permute.xlu0 %303
  %307 = vset.pattern.permute.xlu0 0
  %308 = vperm.xlu0 %307, %v300
  %v309 = vpop.permute.xlu0 %308
  %v311 = vadd.f32 %v304, %v267
  %v312 = vadd.f32 %v304, %v295
  %v313 = vadd.f32 %v309, %v269
  %v314 = vadd.f32 %v309, %v297
  %s315 = smul.u32 0, 256
  %s316 = sadd.s32 %s315, 1
  %s317 = scvt.s32.f32 %s316
  %v318 = vld [vmem:[#allocation2] sm:$0xff]
  %v319 = vld [vmem:[#allocation2 + $0x8] sm:$0xff]
  %v320 = vld [vmem:[#allocation2 + $0x10] sm:$0xff]
  %v321 = vld [vmem:[#allocation2 + $0x18] sm:$0xff]
  %v322 = vstv %s317
  %v323 = vadd.f32 %v318, %v322
  %v324 = vadd.f32 %v319, %v322
  %v325 = vadd.f32 %v320, %v322
  %v326 = vadd.f32 %v321, %v322
  %328 = vset.pattern.permute.xlu0 0
  %329 = vperm.xlu0 %328, %v39
  %v330 = vpop.permute.xlu0 %329
  %333 = vset.pattern.permute.xlu0 0
  %334 = vperm.xlu0 %333, %v40
  %v335 = vpop.permute.xlu0 %334
  %v337 = vsub.f32 %v330, %v311
  %v338 = vsub.f32 %v330, %v312
  %v339 = vsub.f32 %v335, %v313
  %v340 = vsub.f32 %v335, %v314
  %v341 = vadd.f32 %v337, %v323
  %v342 = vadd.f32 %v338, %v324
  %v343 = vadd.f32 %v339, %v325
  %v344 = vadd.f32 %v340, %v326
  %v345 = vrcp.pop %v341
  %v346 = vmul.f32 %v341, %v345
  %v347 = vsub.f32 1.0, %v346
  %v348 = vmul.f32 %v345, %v347
  %v349 = vadd.f32 %v345, %v348
  %vm350 = vweird.f32 %v341
  %vm351 = vweird.f32 %v345
  %vm352 = vmor %vm350, %vm351
  %v353 = vsel %vm352, %v345, %v349
  %v354 = vand.u32 2147483647, %v341
  %vm355 = vcmp.eq.f32.partialorder %v354, 8.507059e+37
  %v356 = vand.u32 %v341, 2147483648
  %v357 = vor.u32 1.1754944e-38, %v356
  %v358 = vsel %vm355, %v357, %v353
  %v359 = vmul.f32 %v337, %v358
  %v360 = vrcp.pop %v342
  %v361 = vmul.f32 %v342, %v360
  %v362 = vsub.f32 1.0, %v361
  %v363 = vmul.f32 %v360, %v362
  %v364 = vadd.f32 %v360, %v363
  %vm365 = vweird.f32 %v342
  %vm366 = vweird.f32 %v360
  %vm367 = vmor %vm365, %vm366
  %v368 = vsel %vm367, %v360, %v364
  %v369 = vand.u32 2147483647, %v342
  %vm370 = vcmp.eq.f32.partialorder %v369, 8.507059e+37
  %v371 = vand.u32 %v342, 2147483648
  %v372 = vor.u32 1.1754944e-38, %v371
  %v373 = vsel %vm370, %v372, %v368
  %v374 = vmul.f32 %v338, %v373
  %v375 = vrcp.pop %v343
  %v376 = vmul.f32 %v343, %v375
  %v377 = vsub.f32 1.0, %v376
  %v378 = vmul.f32 %v375, %v377
  %v379 = vadd.f32 %v375, %v378
  %vm380 = vweird.f32 %v343
  %vm381 = vweird.f32 %v375
  %vm382 = vmor %vm380, %vm381
  %v383 = vsel %vm382, %v375, %v379
  %v384 = vand.u32 2147483647, %v343
  %vm385 = vcmp.eq.f32.partialorder %v384, 8.507059e+37
  %v386 = vand.u32 %v343, 2147483648
  %v387 = vor.u32 1.1754944e-38, %v386
  %v388 = vsel %vm385, %v387, %v383
  %v389 = vmul.f32 %v339, %v388
  %v390 = vrcp.pop %v344
  %v391 = vmul.f32 %v344, %v390
  %v392 = vsub.f32 1.0, %v391
  %v393 = vmul.f32 %v390, %v392
  %v394 = vadd.f32 %v390, %v393
  %vm395 = vweird.f32 %v344
  %vm396 = vweird.f32 %v390
  %vm397 = vmor %vm395, %vm396
  %v398 = vsel %vm397, %v390, %v394
  %v399 = vand.u32 2147483647, %v344
  %vm400 = vcmp.eq.f32.partialorder %v399, 8.507059e+37
  %v401 = vand.u32 %v344, 2147483648
  %v402 = vor.u32 1.1754944e-38, %v401
  %v403 = vsel %vm400, %v402, %v398
  %v404 = vmul.f32 %v340, %v403
  %v405 = vsub.f32 1.0, %v359
  %v406 = vsub.f32 1.0, %v374
  %v407 = vsub.f32 1.0, %v389
  %v408 = vsub.f32 1.0, %v404
  %v409 = vld [vmem:[#allocation4] sm:$0xff]
  %v410 = vld [vmem:[#allocation4 + $0x8] sm:$0xff]
  %v411 = vld [vmem:[#allocation4 + $0x10] sm:$0xff]
  %v412 = vld [vmem:[#allocation4 + $0x18] sm:$0xff]
  %v413 = vld [vmem:[%s0] sm:$0xff]
  %v414 = vld [vmem:[%s0 + $0x8] sm:$0xff]
  %v415 = vld [vmem:[%s0 + $0x10] sm:$0xff]
  %v416 = vld [vmem:[%s0 + $0x18] sm:$0xff]
  %v417 = vmul.f32 %v413, %v405
  %v418 = vmul.f32 %v414, %v406
  %v419 = vmul.f32 %v415, %v407
  %v420 = vmul.f32 %v416, %v408
  %v421 = vadd.f32 %v409, %v417
  %v422 = vadd.f32 %v410, %v418
  %v423 = vadd.f32 %v411, %v419
  %v424 = vadd.f32 %v412, %v420
  %425 = vst [vmem:[#allocation4] sm:$0xff] %v421
  %426 = vst [vmem:[#allocation4 + $0x8] sm:$0xff] %v422
  %427 = vst [vmem:[#allocation4 + $0x10] sm:$0xff] %v423
  %428 = vst [vmem:[#allocation4 + $0x18] sm:$0xff] %v424
  %431 = vrot.lane.b32.xlu0 %v312, 1
  %v432 = vpop.permute.xlu0 %431
  %433 = vrot.lane.b32.xlu0 %v314, 1
  %v434 = vpop.permute.xlu0 %433
  %vm437 = vcmask 7168
  %438 = vst.msk [vmem:[#allocation3] sm:$0xff] %vm437, %v432
  %439 = vst.msk [vmem:[#allocation3 + $0x8] sm:$0xff] %vm437, %v434
  // Predicated region
  $region22: #{_lambda_.1} parent=0 // pred_check
    %p440 = pneg %p17
  $region23: #{_lambda_.1} parent=0 // pred_check_branch
    %442 = sbr.rel (%p440) target = $region25
  $region24: #{_lambda_.1} parent=0 // pred_region
    %v443 = vld [vmem:[#allocation4] sm:$0xff]
    %v444 = vld [vmem:[#allocation4 + $0x8] sm:$0xff]
    %v445 = vld [vmem:[#allocation4 + $0x10] sm:$0xff]
    %v446 = vld [vmem:[#allocation4 + $0x18] sm:$0xff]
    %v447 = vadd.f32 %v443, %v444
    %448 = vadd.xlane.f32.xlu0 %v447
    %v449 = vpop.xlane.xlu0 %448
    %v450 = vadd.f32 %v445, %v446
    %451 = vadd.xlane.f32.xlu0 %v450
    %v452 = vpop.xlane.xlu0 %451
    %453 = vst.msk [vmem:[%s4] sm:$0xff] %vm437, %v449
    %454 = vst.msk [vmem:[%s4 + $0x8] sm:$0xff] %vm437, %v452
  $region25: #{_lambda_.1} parent=0 // pred_fallthru
    _
  // Predicated region
  $region26: #{_lambda_.1} parent=0 // pred_check
    _
  $region27: #{_lambda_.1} parent=0 // pred_check_branch
    %456 = sbr.rel (0) target = $region29
  $region28: #{_lambda_.1} parent=0 // pred_region
    _
  $region29: #{_lambda_.1} parent=0 // pred_fallthru
    _
  // Predicated region
  $region30: #{_lambda_.1} parent=0 // pred_check
    _
  $region31: #{_lambda_.1} parent=0 // pred_check_branch
    %458 = sbr.rel (0) target = $region33
  $region32: #{_lambda_.1} parent=0 // pred_region
    _
  $region33: #{_lambda_.1} parent=0 // pred_fallthru
    _

</llo_original>
